<compile_context>
chip_gen: v7x
topology: tpu7x:2x2x1
jax: 0.10.0
libtpu: 0.0.40
codegen_flags: <defaults>
</compile_context>

<pallas_src>
import jax
import jax.numpy as jnp
from jax.experimental import pallas as pl
from jax.experimental.pallas import tpu as pltpu

_IN_EPS = 1e-3   # InstanceNorm2d eps (as constructed in the module)
_BN_EPS = 1e-5   # BatchNorm2d default eps


def _diff_pool_kernel(x_ref, w_ref, scale_ref, shift_ref, o_ref):
    # x_ref:     (Bt, C, P)  native input dtype
    # w_ref:     (K, C)      f32 conv weight (bias dropped: softmax-shift invariant)
    # scale_ref: (C, 1)      f32 folded BN scale   (gamma * rsqrt(rv + eps))
    # shift_ref: (C, 1)      f32 folded BN shift   (beta - rm * scale)
    # o_ref:     (Bt, K, C)  native input dtype (lane-dense: C on lanes)
    x = x_ref[...].astype(jnp.float32)                          # upcast in-kernel
    bt, c, _ = x.shape
    k = w_ref.shape[0]

    # ---- InstanceNorm2d (affine=False) per (b, c) over P, BN folded in ----
    mean = jnp.mean(x, axis=-1, keepdims=True)                  # (Bt, C, 1)
    xc = x - mean
    var = jnp.mean(xc * xc, axis=-1, keepdims=True)             # biased variance
    scale = scale_ref[...][None, :, :]                          # (1, C, 1)
    shift = shift_ref[...][None, :, :]
    z = xc * (jax.lax.rsqrt(var + _IN_EPS) * scale) + shift     # IN + BN(eval)

    # ---- ReLU ----
    r = jnp.maximum(z, 0.0)                                     # (Bt, C, P)

    # ---- 1x1 conv: per-batch (K, C) @ (C, P) -> (Bt, K, P) ----
    wb = jnp.broadcast_to(w_ref[...][None, :, :], (bt, k, c))
    embed = jax.lax.dot_general(
        wb, r, (((2,), (1,)), ((0,), (0,))),
        preferred_element_type=jnp.float32)                     # (Bt, K, P)

    # ---- softmax over P, normalization deferred past the pooling matmul ----
    m = jnp.max(embed, axis=-1, keepdims=True)
    e = jnp.exp(embed - m)                                      # (Bt, K, P)
    denom = jnp.sum(e, axis=-1, keepdims=True)                  # (Bt, K, 1)

    # ---- pooled[b, k, c] = sum_p e[b, k, p] * x[b, c, p] ----
    pooled = jax.lax.dot_general(
        e, x, (((2,), (2,)), ((0,), (0,))),
        preferred_element_type=jnp.float32)                     # (Bt, K, C)

    inv = pl.reciprocal(denom, approx=False)                    # K*Bt scalars
    o_ref[...] = (pooled * inv).astype(o_ref.dtype)


def _pick_batch_tile(batch, per_batch_bytes):
    """Smallest divisor of `batch` moving >= ~512 KiB/step, capped by VMEM."""
    target = 512 * 1024
    cap = 24 << 20                      # rough per-step cap (fits v7x 64 MiB easily)
    best = 1
    for bt in range(1, batch + 1):
        if batch % bt:
            continue
        if bt > 1 and bt * per_batch_bytes * 8 > cap:
            break
        best = bt
        if bt * per_batch_bytes >= target:
            break
    return best


def diff_pool_pallas(x4, conv_w, conv_b, bn_gamma, bn_beta, bn_rm, bn_rv):
    """Pallas equivalent of diff_pool.forward (inference-mode BatchNorm)."""
    B, C, P, Wd = x4.shape
    assert Wd == 1, "diff_pool assumes the trailing spatial dim is 1"
    K = conv_w.shape[0]
    del conv_b  # softmax over P is invariant to the per-k bias shift

    x = x4.reshape(B, C, P)                         # keep native dtype for the DMA
    w = conv_w.reshape(K, C).astype(jnp.float32)

    # Fold eval-mode BatchNorm into a single scale/shift pair.
    bn_scale = (bn_gamma * jax.lax.rsqrt(bn_rv.astype(jnp.float32) + _BN_EPS))
    bn_shift = bn_beta - bn_rm * bn_scale
    scale2 = bn_scale.reshape(C, 1).astype(jnp.float32)
    shift2 = bn_shift.reshape(C, 1).astype(jnp.float32)

    itemsize = jnp.dtype(x.dtype).itemsize
    bt = _pick_batch_tile(B, C * P * itemsize)
    n_blocks = B // bt

    # Explicit VMEM budget: double-buffered x/out blocks + resident params
    # + f32 in-kernel intermediates, with 2x headroom (<= 64 MiB for v7x).
    per_step_bytes = (
        2 * bt * C * P * itemsize          # x block, double-buffered
        + 2 * bt * K * C * itemsize        # out block, double-buffered
        + 2 * (K * C + 2 * C) * 4          # resident params
        + 5 * bt * C * P * 4               # f32 x / xc / z / r intermediates
        + 3 * bt * K * P * 4               # embed / e intermediates
    )
    vmem_limit = int(min(64 << 20, max(32 << 20, 2 * per_step_bytes)))

    # Mem-bound / tiny-flop kernel: give XLA an honest cost for scheduling.
    flops = int(B * (2 * K * C * P + 2 * K * C * P + 10 * C * P + 6 * K * P))
    bytes_accessed = int(x.size * itemsize + w.nbytes + scale2.nbytes
                         + shift2.nbytes + B * K * C * itemsize)
    cost = pl.CostEstimate(flops=flops,
                           transcendentals=int(B * (K * P + C + K)),
                           bytes_accessed=bytes_accessed)

    out_kc = pl.pallas_call(
        _diff_pool_kernel,
        out_shape=jax.ShapeDtypeStruct((B, K, C), x.dtype),
        grid=(n_blocks,),
        in_specs=[
            pl.BlockSpec((bt, C, P), lambda i: (i, 0, 0)),   # x (native dtype)
            pl.BlockSpec((K, C), lambda i: (0, 0)),          # conv weight (resident)
            pl.BlockSpec((C, 1), lambda i: (0, 0)),          # folded BN scale
            pl.BlockSpec((C, 1), lambda i: (0, 0)),          # folded BN shift
        ],
        out_specs=pl.BlockSpec((bt, K, C), lambda i: (i, 0, 0)),
        compiler_params=pltpu.CompilerParams(
            dimension_semantics=("parallel",),
            vmem_limit_bytes=vmem_limit),
        cost_estimate=cost,
    )(x, w, scale2, shift2)

    # (B, K, C) -> (B, C, K, 1): pure layout plumbing, leave it to XLA.
    return jnp.transpose(out_kc, (0, 2, 1)).reshape(B, C, K, 1)


def _diff_pool_ref(x4, conv_w, conv_b, bn_gamma, bn_beta, bn_rm, bn_rv):
    """Pure-JAX reference with identical (inference-mode) semantics, bias kept."""
    x = x4[..., 0].astype(jnp.float32)                               # (B, C, P)
    K, C = conv_w.shape[0], x.shape[1]
    w = conv_w.reshape(K, C).astype(jnp.float32)
    mean = jnp.mean(x, axis=-1, keepdims=True)
    var = jnp.mean((x - mean) ** 2, axis=-1, keepdims=True)
    y = (x - mean) / jnp.sqrt(var + _IN_EPS)
    z = ((y - bn_rm[None, :, None]) / jnp.sqrt(bn_rv[None, :, None] + _BN_EPS)
         * bn_gamma[None, :, None] + bn_beta[None, :, None])
    r = jnp.maximum(z, 0.0)
    embed = jnp.einsum("kc,bcp->bkp", w, r) + conv_b[None, :, None]
    s = jax.nn.softmax(embed, axis=-1)                               # (B, K, P)
    out = jnp.einsum("bcp,bkp->bck", x, s)                           # (B, C, K)
    return out[..., None].astype(x4.dtype)


if __name__ == "__main__":
    B, C, P, K = 2, 4, 16, 8   # batch, in_channel, points, output_points

    key = jax.random.PRNGKey(0)
    kx, kw, kb = jax.random.split(key, 3)
    x = jax.random.normal(kx, (B, C, P, 1), dtype=jnp.float32)
    conv_w = 0.5 * jax.random.normal(kw, (K, C, 1, 1), dtype=jnp.float32)  # 1x1 conv
    conv_b = 0.1 * jax.random.normal(kb, (K,), dtype=jnp.float32)
    bn_gamma = jnp.ones((C,), jnp.float32)      # PyTorch BatchNorm2d defaults
    bn_beta = jnp.zeros((C,), jnp.float32)
    bn_rm = jnp.zeros((C,), jnp.float32)
    bn_rv = jnp.ones((C,), jnp.float32)

    out = diff_pool_pallas(x, conv_w, conv_b, bn_gamma, bn_beta, bn_rm, bn_rv)
    out = jax.block_until_ready(out)

    ref = _diff_pool_ref(x, conv_w, conv_b, bn_gamma, bn_beta, bn_rm, bn_rv)
    assert out.shape == ref.shape == (B, C, K, 1), (out.shape, ref.shape)
    assert out.dtype == ref.dtype
    assert bool(jnp.allclose(out, ref, atol=1e-4, rtol=1e-4)), \
        "Pallas diff_pool mismatch vs reference"

    print("KERNEL_OK")
</pallas_src>

<mosaic_0001>
module attributes {stable_mosaic.version = 11 : i64} {
  func.func @_diff_pool_kernel(%arg0: i32, %arg1: memref<2x4x16xf32, #tpu.memory_space<vmem>>, %arg2: memref<8x4xf32, #tpu.memory_space<vmem>>, %arg3: memref<4x1xf32, #tpu.memory_space<vmem>>, %arg4: memref<4x1xf32, #tpu.memory_space<vmem>>, %arg5: memref<2x8x4xf32, #tpu.memory_space<vmem>>) attributes {dimension_semantics = [#tpu.dimension_semantics<parallel>], iteration_bounds = array<i64: 1>, scalar_prefetch = 0 : i64, scratch_operands = 0 : i64, tpu.core_type = #tpu.core_type<tc>, window_params = [{transform_indices = @transform_0, window_bounds = array<i64: 2, 4, 16>}, {pipeline_mode = #tpu.pipeline_mode<synchronous>, transform_indices = @transform_1, window_bounds = array<i64: 8, 4>}, {pipeline_mode = #tpu.pipeline_mode<synchronous>, transform_indices = @transform_2, window_bounds = array<i64: 4, 1>}, {pipeline_mode = #tpu.pipeline_mode<synchronous>, transform_indices = @transform_3, window_bounds = array<i64: 4, 1>}, {transform_indices = @transform_4, window_bounds = array<i64: 2, 8, 4>}]} {
    %c0 = arith.constant 0 : index
    %c0_0 = arith.constant 0 : index
    %c0_1 = arith.constant 0 : index
    %0 = vector.load %arg1[%c0, %c0_0, %c0_1] : memref<2x4x16xf32, #tpu.memory_space<vmem>>, vector<2x4x16xf32>
    %cst = arith.constant dense<0.000000e+00> : vector<2x4xf32>
    %1 = vector.multi_reduction <add>, %0, %cst [2] : vector<2x4x16xf32> to vector<2x4xf32>
    %2 = vector.shape_cast %1 : vector<2x4xf32> to vector<2x4x1xf32>
    %cst_2 = arith.constant 1.600000e+01 : f32
    %3 = vector.broadcast %cst_2 : f32 to vector<2x4x1xf32>
    %4 = arith.divf %2, %3 : vector<2x4x1xf32>
    %5 = vector.broadcast %4 : vector<2x4x1xf32> to vector<2x4x16xf32>
    %6 = arith.subf %0, %5 : vector<2x4x16xf32>
    %7 = arith.mulf %6, %6 : vector<2x4x16xf32>
    %cst_3 = arith.constant dense<0.000000e+00> : vector<2x4xf32>
    %8 = vector.multi_reduction <add>, %7, %cst_3 [2] : vector<2x4x16xf32> to vector<2x4xf32>
    %9 = vector.shape_cast %8 : vector<2x4xf32> to vector<2x4x1xf32>
    %cst_4 = arith.constant 1.600000e+01 : f32
    %10 = vector.broadcast %cst_4 : f32 to vector<2x4x1xf32>
    %11 = arith.divf %9, %10 : vector<2x4x1xf32>
    %c0_5 = arith.constant 0 : index
    %c0_6 = arith.constant 0 : index
    %12 = vector.load %arg3[%c0_5, %c0_6] : memref<4x1xf32, #tpu.memory_space<vmem>>, vector<4x1xf32>
    %13 = vector.shape_cast %12 : vector<4x1xf32> to vector<1x4x1xf32>
    %c0_7 = arith.constant 0 : index
    %c0_8 = arith.constant 0 : index
    %14 = vector.load %arg4[%c0_7, %c0_8] : memref<4x1xf32, #tpu.memory_space<vmem>>, vector<4x1xf32>
    %15 = vector.shape_cast %14 : vector<4x1xf32> to vector<1x4x1xf32>
    %cst_9 = arith.constant 1.000000e-03 : f32
    %16 = vector.broadcast %cst_9 : f32 to vector<2x4x1xf32>
    %17 = arith.addf %11, %16 : vector<2x4x1xf32>
    %18 = math.rsqrt %17 : vector<2x4x1xf32>
    %19 = vector.broadcast %13 : vector<1x4x1xf32> to vector<2x4x1xf32>
    %20 = arith.mulf %18, %19 : vector<2x4x1xf32>
    %21 = vector.broadcast %20 : vector<2x4x1xf32> to vector<2x4x16xf32>
    %22 = arith.mulf %6, %21 : vector<2x4x16xf32>
    %23 = vector.broadcast %15 : vector<1x4x1xf32> to vector<2x4x16xf32>
    %24 = arith.addf %22, %23 : vector<2x4x16xf32>
    %cst_10 = arith.constant 0.000000e+00 : f32
    %25 = vector.broadcast %cst_10 : f32 to vector<2x4x16xf32>
    %26 = arith.maximumf %24, %25 : vector<2x4x16xf32>
    %c0_11 = arith.constant 0 : index
    %c0_12 = arith.constant 0 : index
    %27 = vector.load %arg2[%c0_11, %c0_12] : memref<8x4xf32, #tpu.memory_space<vmem>>, vector<8x4xf32>
    %28 = vector.shape_cast %27 : vector<8x4xf32> to vector<1x8x4xf32>
    %29 = vector.shape_cast %28 : vector<1x8x4xf32> to vector<1x8x4xf32>
    %30 = vector.broadcast %29 : vector<1x8x4xf32> to vector<2x8x4xf32>
    %cst_13 = arith.constant dense<0.000000e+00> : vector<2x8x16xf32>
    %31 = tpu.matmul %30, %26, %cst_13 {dimension_numbers = #tpu.dot_dimension_numbers<[2], [1], [1], [2], [0, 0, 0, 1, 1, 2], [0], [0]>} : vector<2x8x4xf32>, vector<2x4x16xf32>, vector<2x8x16xf32> -> vector<2x8x16xf32>
    %cst_14 = arith.constant dense<0xFF800000> : vector<2x8xf32>
    %32 = vector.multi_reduction <maximumf>, %31, %cst_14 [2] : vector<2x8x16xf32> to vector<2x8xf32>
    %33 = vector.shape_cast %32 : vector<2x8xf32> to vector<2x8x1xf32>
    %34 = vector.broadcast %33 : vector<2x8x1xf32> to vector<2x8x16xf32>
    %35 = arith.subf %31, %34 : vector<2x8x16xf32>
    %36 = math.exp %35 : vector<2x8x16xf32>
    %cst_15 = arith.constant dense<0.000000e+00> : vector<2x8xf32>
    %37 = vector.multi_reduction <add>, %36, %cst_15 [2] : vector<2x8x16xf32> to vector<2x8xf32>
    %38 = vector.shape_cast %37 : vector<2x8xf32> to vector<2x8x1xf32>
    %cst_16 = arith.constant dense<0.000000e+00> : vector<2x8x4xf32>
    %39 = tpu.matmul %36, %0, %cst_16 {dimension_numbers = #tpu.dot_dimension_numbers<[2], [2], [1], [1], [0, 0, 0, 1, 1, 1], [0], [0]>} : vector<2x8x16xf32>, vector<2x4x16xf32>, vector<2x8x4xf32> -> vector<2x8x4xf32>
    %40 = tpu.reciprocal %38 : vector<2x8x1xf32> -> vector<2x8x1xf32>
    %41 = vector.broadcast %40 : vector<2x8x1xf32> to vector<2x8x4xf32>
    %42 = arith.mulf %39, %41 : vector<2x8x4xf32>
    %c0_17 = arith.constant 0 : index
    %c0_18 = arith.constant 0 : index
    %c0_19 = arith.constant 0 : index
    %43 = vector.load %arg5[%c0_17, %c0_18, %c0_19] : memref<2x8x4xf32, #tpu.memory_space<vmem>>, vector<2x8x4xf32>
    tpu.vector_store %arg5[%c0_17, %c0_18, %c0_19], %42 {strides = array<i32>} : memref<2x8x4xf32, #tpu.memory_space<vmem>>, vector<2x8x4xf32>,
    return
  }
  func.func @transform_0(%arg0: i32) -> (i32, i32, i32) {
    %c0_i32 = arith.constant 0 : i32
    %c0_i32_0 = arith.constant 0 : i32
    %c0_i32_1 = arith.constant 0 : i32
    return %arg0, %c0_i32, %c0_i32_0 : i32, i32, i32
  }
  func.func @transform_1(%arg0: i32) -> (i32, i32) {
    %c0_i32 = arith.constant 0 : i32
    %c0_i32_0 = arith.constant 0 : i32
    %c0_i32_1 = arith.constant 0 : i32
    return %c0_i32, %c0_i32_0 : i32, i32
  }
  func.func @transform_2(%arg0: i32) -> (i32, i32) {
    %c0_i32 = arith.constant 0 : i32
    %c0_i32_0 = arith.constant 0 : i32
    %c0_i32_1 = arith.constant 0 : i32
    return %c0_i32, %c0_i32_0 : i32, i32
  }
  func.func @transform_3(%arg0: i32) -> (i32, i32) {
    %c0_i32 = arith.constant 0 : i32
    %c0_i32_0 = arith.constant 0 : i32
    %c0_i32_1 = arith.constant 0 : i32
    return %c0_i32, %c0_i32_0 : i32, i32
  }
  func.func @transform_4(%arg0: i32) -> (i32, i32, i32) {
    %c0_i32 = arith.constant 0 : i32
    %c0_i32_0 = arith.constant 0 : i32
    %c0_i32_1 = arith.constant 0 : i32
    return %arg0, %c0_i32, %c0_i32_0 : i32, i32, i32
  }
}

</mosaic_0001>

<llo_original>
// kernel: tpu_custom_call.1
$region0: #{tpu_custom_call.1}
  #allocation0 [shape = 'u32[]', space=smem, size = 0x4, offset = 0x4, fixed_abs, tag = 'smem constant byte address 0x4 - core index']
  #allocation1 [shape = 'u32[144,128]{1,0:T(1,128)}', space=vmem, size = 0x12000, scoped, tag = 'internal scratch']
  %s0 = inlined_call_operand.vmem [shape: f32[2,4,16], index: 0, kind: input, shape index: {}]
  %s1 = inlined_call_operand.vmem [shape: f32[8,4], index: 1, kind: input, shape index: {}]
  %s2 = inlined_call_operand.vmem [shape: f32[4,1], index: 2, kind: input, shape index: {}]
  %s3 = inlined_call_operand.vmem [shape: f32[4,1], index: 3, kind: input, shape index: {}]
  %s4 = inlined_call_operand.vmem [shape: f32[2,8,4], index: 4, kind: output, shape index: {}]
  %s5 = sld [smem:[#allocation0]]
  $region26: #{tpu_custom_call.1} parent=0
    _
  %s7 = ssub.s32 1, %s5
  %s8 = scalar_select 0, %s7, %s5
  // Predicated region
  $region2: #{tpu_custom_call.1} parent=0 // pred_check
    _
  $region3: #{tpu_custom_call.1} parent=0 // pred_check_branch
    %10 = sbr.rel (0) target = $region5
  $region4: #{tpu_custom_call.1} parent=0 // pred_region
    _
  $region5: #{tpu_custom_call.1} parent=0 // pred_fallthru
    _
  // Predicated region
  $region6: #{tpu_custom_call.1} parent=0 // pred_check
    _
  $region7: #{tpu_custom_call.1} parent=0 // pred_check_branch
    %12 = sbr.rel (0) target = $region9
  $region8: #{tpu_custom_call.1} parent=0 // pred_region
    _
  $region9: #{tpu_custom_call.1} parent=0 // pred_fallthru
    _
  // Predicated region
  $region10: #{tpu_custom_call.1} parent=0 // pred_check
    _
  $region11: #{tpu_custom_call.1} parent=0 // pred_check_branch
    %14 = sbr.rel (0) target = $region13
  $region12: #{tpu_custom_call.1} parent=0 // pred_region
    _
  $region13: #{tpu_custom_call.1} parent=0 // pred_fallthru
    _
  // Predicated region
  $region14: #{tpu_custom_call.1} parent=0 // pred_check
    _
  $region15: #{tpu_custom_call.1} parent=0 // pred_check_branch
    %16 = sbr.rel (0) target = $region17
  $region16: #{tpu_custom_call.1} parent=0 // pred_region
    _
  $region17: #{tpu_custom_call.1} parent=0 // pred_fallthru
    _
  %v17 = vld [vmem:[%s0] sm:$0xf]
  %v18 = vld [vmem:[%s0 + $0x4] sm:$0xf]
  %vm19 = vcmask 125952
  %v20 = vsel %vm19, %v17, 0.0
  %21 = vadd.xlane.f32.xlu0 %v20
  %v22 = vpop.xlane.xlu0 %21
  %v23 = vsel %vm19, %v18, 0.0
  %24 = vadd.xlane.f32.xlu0 %v23
  %v25 = vpop.xlane.xlu0 %24
  %v26 = vrcp.pop 16.0
  %v27 = vmul.f32 %v22, %v26
  %v28 = vmul.f32 %v25, %v26
  %v29 = vsub.f32 %v17, %v27
  %v30 = vsub.f32 %v18, %v28
  %v31 = vmul.f32 %v29, %v29
  %v32 = vmul.f32 %v30, %v30
  %v33 = vsel %vm19, %v31, 0.0
  %34 = vadd.xlane.f32.xlu0 %v33
  %v35 = vpop.xlane.xlu0 %34
  %v36 = vsel %vm19, %v32, 0.0
  %37 = vadd.xlane.f32.xlu0 %v36
  %v38 = vpop.xlane.xlu0 %37
  %v39 = vmul.f32 %v35, %v26
  %v40 = vmul.f32 %v38, %v26
  %v41 = vld [vmem:[%s2] sm:$0xf]
  %v42 = vld [vmem:[%s3] sm:$0xf]
  %v43 = vadd.f32 %v39, 0.001
  %v44 = vadd.f32 %v40, 0.001
  %v45 = vrsqrt.pop %v43
  %v46 = vrsqrt.pop %v44
  %v47 = vmul.f32 %v45, %v41
  %v48 = vmul.f32 %v46, %v41
  %50 = vset.pattern.permute.xlu0 0
  %51 = vperm.xlu0 %50, %v47
  %v52 = vpop.permute.xlu0 %51
  %55 = vset.pattern.permute.xlu0 0
  %56 = vperm.xlu0 %55, %v48
  %v57 = vpop.permute.xlu0 %56
  %v59 = vmul.f32 %v29, %v52
  %v60 = vmul.f32 %v30, %v57
  %62 = vset.pattern.permute.xlu0 0
  %63 = vperm.xlu0 %62, %v42
  %v64 = vpop.permute.xlu0 %63
  %v66 = vadd.f32 %v59, %v64
  %v67 = vadd.f32 %v60, %v64
  %v68 = vmax.f32 %v66, 0.0
  %v69 = vmax.f32 %v67, 0.0
  %v70 = vld [vmem:[%s1] sm:$0xff]
  %vm71 = vcmask 31744
  %v73 = vsel %vm71, %v70, 0
  %vm75 = vcmask 1043456
  %v77 = vsel %vm75, %v68, 0
  %79 = vmatprep.subr.mxu0 0.0
  %80 = vmatpush1.msra.mxu0 %v77
  %81 = vmatprep.subr.mxu0 0.0
  %82 = vmatpush1.msra.mxu0 0.0
  %83 = vmatprep.subr.mxu0 0.0
  %84 = vmatpush1.msra.mxu0 0.0
  %85 = vmatprep.subr.mxu0 0.0
  %86 = vmatpush1.msra.mxu0 0.0
  %87 = vmatprep.subr.mxu0 0.0
  %88 = vmatpush1.msra.mxu0 0.0
  %89 = vmatprep.subr.mxu0 0.0
  %90 = vmatpush1.msra.mxu0 0.0
  %91 = vmatprep.subr.mxu0 0.0
  %92 = vmatpush1.msra.mxu0 0.0
  %93 = vmatprep.subr.mxu0 0.0
  %94 = vmatpush1.msra.mxu0 0.0
  %95 = vmatprep.subr.mxu0 0.0
  %96 = vmatpush1.msra.mxu0 0.0
  %97 = vmatprep.subr.mxu0 0.0
  %98 = vmatpush1.msra.mxu0 0.0
  %99 = vmatprep.subr.mxu0 0.0
  %100 = vmatpush1.msra.mxu0 0.0
  %101 = vmatprep.subr.mxu0 0.0
  %102 = vmatpush1.msra.mxu0 0.0
  %103 = vmatprep.subr.mxu0 0.0
  %104 = vmatpush1.msra.mxu0 0.0
  %105 = vmatprep.subr.mxu0 0.0
  %106 = vmatpush1.msra.mxu0 0.0
  %107 = vmatprep.subr.mxu0 0.0
  %108 = vmatpush1.msra.mxu0 0.0
  %109 = vmatprep.subr.mxu0 0.0
  %110 = vmatpush1.msra.mxu0 0.0
  %111 = vmatprep.subr.mxu0 0.0
  %112 = vmatpush1.msra.mxu0 0.0
  %113 = vmatprep.subr.mxu0 0.0
  %114 = vmatpush1.msra.mxu0 0.0
  %115 = vmatprep.subr.mxu0 0.0
  %116 = vmatpush1.msra.mxu0 0.0
  %117 = vmatprep.subr.mxu0 0.0
  %118 = vmatpush1.msra.mxu0 0.0
  %119 = vmatprep.subr.mxu0 0.0
  %120 = vmatpush1.msra.mxu0 0.0
  %121 = vmatprep.subr.mxu0 0.0
  %122 = vmatpush1.msra.mxu0 0.0
  %123 = vmatprep.subr.mxu0 0.0
  %124 = vmatpush1.msra.mxu0 0.0
  %125 = vmatprep.subr.mxu0 0.0
  %126 = vmatpush1.msra.mxu0 0.0
  %127 = vmatprep.subr.mxu0 0.0
  %128 = vmatpush1.msra.mxu0 0.0
  %129 = vmatprep.subr.mxu0 0.0
  %130 = vmatpush1.msra.mxu0 0.0
  %131 = vmatprep.subr.mxu0 0.0
  %132 = vmatpush1.msra.mxu0 0.0
  %133 = vmatprep.subr.mxu0 0.0
  %134 = vmatpush1.msra.mxu0 0.0
  %135 = vmatprep.subr.mxu0 0.0
  %136 = vmatpush1.msra.mxu0 0.0
  %137 = vmatprep.subr.mxu0 0.0
  %138 = vmatpush1.msra.mxu0 0.0
  %139 = vmatprep.subr.mxu0 0.0
  %140 = vmatpush1.msra.mxu0 0.0
  %141 = vmatprep.subr.mxu0 0.0
  %142 = vmatpush1.msra.mxu0 0.0
  %143 = vmatprep.mubr.f32.mxu0 0.0
  %144 = vmatmul.mubr.f32.gmra.mrb[0].mxu0 %v73
  %v145 = vpop.f32.mrb[0].mxu0
  %v146 = vadd.f32 0.0, %v145
  %v147 = vpop.f32.mrb[0].mxu0
  %148 = vdwg.mxu0
  %v150 = vsel %vm75, %v69, 0
  %152 = vmatprep.subr.mxu0 0.0
  %153 = vmatpush1.msra.mxu0 %v150
  %154 = vmatprep.subr.mxu0 0.0
  %155 = vmatpush1.msra.mxu0 0.0
  %156 = vmatprep.subr.mxu0 0.0
  %157 = vmatpush1.msra.mxu0 0.0
  %158 = vmatprep.subr.mxu0 0.0
  %159 = vmatpush1.msra.mxu0 0.0
  %160 = vmatprep.subr.mxu0 0.0
  %161 = vmatpush1.msra.mxu0 0.0
  %162 = vmatprep.subr.mxu0 0.0
  %163 = vmatpush1.msra.mxu0 0.0
  %164 = vmatprep.subr.mxu0 0.0
  %165 = vmatpush1.msra.mxu0 0.0
  %166 = vmatprep.subr.mxu0 0.0
  %167 = vmatpush1.msra.mxu0 0.0
  %168 = vmatprep.subr.mxu0 0.0
  %169 = vmatpush1.msra.mxu0 0.0
  %170 = vmatprep.subr.mxu0 0.0
  %171 = vmatpush1.msra.mxu0 0.0
  %172 = vmatprep.subr.mxu0 0.0
  %173 = vmatpush1.msra.mxu0 0.0
  %174 = vmatprep.subr.mxu0 0.0
  %175 = vmatpush1.msra.mxu0 0.0
  %176 = vmatprep.subr.mxu0 0.0
  %177 = vmatpush1.msra.mxu0 0.0
  %178 = vmatprep.subr.mxu0 0.0
  %179 = vmatpush1.msra.mxu0 0.0
  %180 = vmatprep.subr.mxu0 0.0
  %181 = vmatpush1.msra.mxu0 0.0
  %182 = vmatprep.subr.mxu0 0.0
  %183 = vmatpush1.msra.mxu0 0.0
  %184 = vmatprep.subr.mxu0 0.0
  %185 = vmatpush1.msra.mxu0 0.0
  %186 = vmatprep.subr.mxu0 0.0
  %187 = vmatpush1.msra.mxu0 0.0
  %188 = vmatprep.subr.mxu0 0.0
  %189 = vmatpush1.msra.mxu0 0.0
  %190 = vmatprep.subr.mxu0 0.0
  %191 = vmatpush1.msra.mxu0 0.0
  %192 = vmatprep.subr.mxu0 0.0
  %193 = vmatpush1.msra.mxu0 0.0
  %194 = vmatprep.subr.mxu0 0.0
  %195 = vmatpush1.msra.mxu0 0.0
  %196 = vmatprep.subr.mxu0 0.0
  %197 = vmatpush1.msra.mxu0 0.0
  %198 = vmatprep.subr.mxu0 0.0
  %199 = vmatpush1.msra.mxu0 0.0
  %200 = vmatprep.subr.mxu0 0.0
  %201 = vmatpush1.msra.mxu0 0.0
  %202 = vmatprep.subr.mxu0 0.0
  %203 = vmatpush1.msra.mxu0 0.0
  %204 = vmatprep.subr.mxu0 0.0
  %205 = vmatpush1.msra.mxu0 0.0
  %206 = vmatprep.subr.mxu0 0.0
  %207 = vmatpush1.msra.mxu0 0.0
  %208 = vmatprep.subr.mxu0 0.0
  %209 = vmatpush1.msra.mxu0 0.0
  %210 = vmatprep.subr.mxu0 0.0
  %211 = vmatpush1.msra.mxu0 0.0
  %212 = vmatprep.subr.mxu0 0.0
  %213 = vmatpush1.msra.mxu0 0.0
  %214 = vmatprep.subr.mxu0 0.0
  %215 = vmatpush1.msra.mxu0 0.0
  %216 = vmatprep.mubr.f32.mxu0 0.0
  %217 = vmatmul.mubr.f32.gmra.mrb[0].mxu0 %v73
  %v218 = vpop.f32.mrb[0].mxu0
  %v219 = vadd.f32 0.0, %v218
  %v220 = vpop.f32.mrb[0].mxu0
  %221 = vdwg.mxu0
  %vm222 = vcmask 130048
  %v223 = vsel %vm222, %v146, -inf
  %224 = vmax.xlane.f32.xlu0 %v223
  %v225 = vpop.xlane.xlu0 %224
  %v226 = vsel %vm222, %v219, -inf
  %227 = vmax.xlane.f32.xlu0 %v226
  %v228 = vpop.xlane.xlu0 %227
  %v229 = vsub.f32 %v146, %v225
  %v230 = vsub.f32 %v219, %v228
  %v231 = vmul.f32 %v229, 1.442695
  %v232 = vpow.pop %v231
  %v233 = vmul.f32 %v230, 1.442695
  %v234 = vpow.pop %v233
  %v235 = vsel %vm222, %v232, 0.0
  %236 = vadd.xlane.f32.xlu0 %v235
  %v237 = vpop.xlane.xlu0 %236
  %v238 = vsel %vm222, %v234, 0.0
  %239 = vadd.xlane.f32.xlu0 %v238
  %v240 = vpop.xlane.xlu0 %239
  %v242 = vsel %vm222, %v232, 0
  %v245 = vsel %vm222, %v17, 0
  %247 = vmatprep.subr.mxu0 0.0
  %248 = vmatpush1.xpose.msra.mxu0 %v245
  %249 = vmatprep.subr.mxu0 0.0
  %250 = vmatpush1.xpose.msra.mxu0 0.0
  %251 = vmatprep.subr.mxu0 0.0
  %252 = vmatpush1.xpose.msra.mxu0 0.0
  %253 = vmatprep.subr.mxu0 0.0
  %254 = vmatpush1.xpose.msra.mxu0 0.0
  %255 = vmatprep.subr.mxu0 0.0
  %256 = vmatpush1.xpose.msra.mxu0 0.0
  %257 = vmatprep.subr.mxu0 0.0
  %258 = vmatpush1.xpose.msra.mxu0 0.0
  %259 = vmatprep.subr.mxu0 0.0
  %260 = vmatpush1.xpose.msra.mxu0 0.0
  %261 = vmatprep.subr.mxu0 0.0
  %262 = vmatpush1.xpose.msra.mxu0 0.0
  %263 = vmatprep.subr.mxu0 0.0
  %264 = vmatpush1.xpose.msra.mxu0 0.0
  %265 = vmatprep.subr.mxu0 0.0
  %266 = vmatpush1.xpose.msra.mxu0 0.0
  %267 = vmatprep.subr.mxu0 0.0
  %268 = vmatpush1.xpose.msra.mxu0 0.0
  %269 = vmatprep.subr.mxu0 0.0
  %270 = vmatpush1.xpose.msra.mxu0 0.0
  %271 = vmatprep.subr.mxu0 0.0
  %272 = vmatpush1.xpose.msra.mxu0 0.0
  %273 = vmatprep.subr.mxu0 0.0
  %274 = vmatpush1.xpose.msra.mxu0 0.0
  %275 = vmatprep.subr.mxu0 0.0
  %276 = vmatpush1.xpose.msra.mxu0 0.0
  %277 = vmatprep.subr.mxu0 0.0
  %278 = vmatpush1.xpose.msra.mxu0 0.0
  %279 = vmatprep.subr.mxu0 0.0
  %280 = vmatpush1.xpose.msra.mxu0 0.0
  %281 = vmatprep.subr.mxu0 0.0
  %282 = vmatpush1.xpose.msra.mxu0 0.0
  %283 = vmatprep.subr.mxu0 0.0
  %284 = vmatpush1.xpose.msra.mxu0 0.0
  %285 = vmatprep.subr.mxu0 0.0
  %286 = vmatpush1.xpose.msra.mxu0 0.0
  %287 = vmatprep.subr.mxu0 0.0
  %288 = vmatpush1.xpose.msra.mxu0 0.0
  %289 = vmatprep.subr.mxu0 0.0
  %290 = vmatpush1.xpose.msra.mxu0 0.0
  %291 = vmatprep.subr.mxu0 0.0
  %292 = vmatpush1.xpose.msra.mxu0 0.0
  %293 = vmatprep.subr.mxu0 0.0
  %294 = vmatpush1.xpose.msra.mxu0 0.0
  %295 = vmatprep.subr.mxu0 0.0
  %296 = vmatpush1.xpose.msra.mxu0 0.0
  %297 = vmatprep.subr.mxu0 0.0
  %298 = vmatpush1.xpose.msra.mxu0 0.0
  %299 = vmatprep.subr.mxu0 0.0
  %300 = vmatpush1.xpose.msra.mxu0 0.0
  %301 = vmatprep.subr.mxu0 0.0
  %302 = vmatpush1.xpose.msra.mxu0 0.0
  %303 = vmatprep.subr.mxu0 0.0
  %304 = vmatpush1.xpose.msra.mxu0 0.0
  %305 = vmatprep.subr.mxu0 0.0
  %306 = vmatpush1.xpose.msra.mxu0 0.0
  %307 = vmatprep.subr.mxu0 0.0
  %308 = vmatpush1.xpose.msra.mxu0 0.0
  %309 = vmatprep.subr.mxu0 0.0
  %310 = vmatpush1.xpose.msra.mxu0 0.0
  %311 = vmatprep.mubr.f32.mxu0 0.0
  %312 = vmatmul.mubr.f32.gmra.mrb[0].mxu0 %v242
  %v313 = vpop.f32.mrb[0].mxu0
  %v314 = vadd.f32 0.0, %v313
  %v315 = vpop.f32.mrb[0].mxu0
  %316 = vdwg.mxu0
  %v318 = vsel %vm222, %v234, 0
  %v321 = vsel %vm222, %v18, 0
  %323 = vmatprep.subr.mxu0 0.0
  %324 = vmatpush1.xpose.msra.mxu0 %v321
  %325 = vmatprep.subr.mxu0 0.0
  %326 = vmatpush1.xpose.msra.mxu0 0.0
  %327 = vmatprep.subr.mxu0 0.0
  %328 = vmatpush1.xpose.msra.mxu0 0.0
  %329 = vmatprep.subr.mxu0 0.0
  %330 = vmatpush1.xpose.msra.mxu0 0.0
  %331 = vmatprep.subr.mxu0 0.0
  %332 = vmatpush1.xpose.msra.mxu0 0.0
  %333 = vmatprep.subr.mxu0 0.0
  %334 = vmatpush1.xpose.msra.mxu0 0.0
  %335 = vmatprep.subr.mxu0 0.0
  %336 = vmatpush1.xpose.msra.mxu0 0.0
  %337 = vmatprep.subr.mxu0 0.0
  %338 = vmatpush1.xpose.msra.mxu0 0.0
  %339 = vmatprep.subr.mxu0 0.0
  %340 = vmatpush1.xpose.msra.mxu0 0.0
  %341 = vmatprep.subr.mxu0 0.0
  %342 = vmatpush1.xpose.msra.mxu0 0.0
  %343 = vmatprep.subr.mxu0 0.0
  %344 = vmatpush1.xpose.msra.mxu0 0.0
  %345 = vmatprep.subr.mxu0 0.0
  %346 = vmatpush1.xpose.msra.mxu0 0.0
  %347 = vmatprep.subr.mxu0 0.0
  %348 = vmatpush1.xpose.msra.mxu0 0.0
  %349 = vmatprep.subr.mxu0 0.0
  %350 = vmatpush1.xpose.msra.mxu0 0.0
  %351 = vmatprep.subr.mxu0 0.0
  %352 = vmatpush1.xpose.msra.mxu0 0.0
  %353 = vmatprep.subr.mxu0 0.0
  %354 = vmatpush1.xpose.msra.mxu0 0.0
  %355 = vmatprep.subr.mxu0 0.0
  %356 = vmatpush1.xpose.msra.mxu0 0.0
  %357 = vmatprep.subr.mxu0 0.0
  %358 = vmatpush1.xpose.msra.mxu0 0.0
  %359 = vmatprep.subr.mxu0 0.0
  %360 = vmatpush1.xpose.msra.mxu0 0.0
  %361 = vmatprep.subr.mxu0 0.0
  %362 = vmatpush1.xpose.msra.mxu0 0.0
  %363 = vmatprep.subr.mxu0 0.0
  %364 = vmatpush1.xpose.msra.mxu0 0.0
  %365 = vmatprep.subr.mxu0 0.0
  %366 = vmatpush1.xpose.msra.mxu0 0.0
  %367 = vmatprep.subr.mxu0 0.0
  %368 = vmatpush1.xpose.msra.mxu0 0.0
  %369 = vmatprep.subr.mxu0 0.0
  %370 = vmatpush1.xpose.msra.mxu0 0.0
  %371 = vmatprep.subr.mxu0 0.0
  %372 = vmatpush1.xpose.msra.mxu0 0.0
  %373 = vmatprep.subr.mxu0 0.0
  %374 = vmatpush1.xpose.msra.mxu0 0.0
  %375 = vmatprep.subr.mxu0 0.0
  %376 = vmatpush1.xpose.msra.mxu0 0.0
  %377 = vmatprep.subr.mxu0 0.0
  %378 = vmatpush1.xpose.msra.mxu0 0.0
  %379 = vmatprep.subr.mxu0 0.0
  %380 = vmatpush1.xpose.msra.mxu0 0.0
  %381 = vmatprep.subr.mxu0 0.0
  %382 = vmatpush1.xpose.msra.mxu0 0.0
  %383 = vmatprep.subr.mxu0 0.0
  %384 = vmatpush1.xpose.msra.mxu0 0.0
  %385 = vmatprep.subr.mxu0 0.0
  %386 = vmatpush1.xpose.msra.mxu0 0.0
  %387 = vmatprep.mubr.f32.mxu0 0.0
  %388 = vmatmul.mubr.f32.gmra.mrb[0].mxu0 %v318
  %v389 = vpop.f32.mrb[0].mxu0
  %v390 = vadd.f32 0.0, %v389
  %v391 = vpop.f32.mrb[0].mxu0
  %392 = vdwg.mxu0
  %v393 = vrcp.pop %v237
  %v394 = vrcp.pop %v240
  %v395 = vmul.f32 %v314, %v393
  %v396 = vmul.f32 %v390, %v394
  %397 = vst.msk [vmem:[%s4] sm:$0xff] %vm71, %v395
  %398 = vst.msk [vmem:[%s4 + $0x8] sm:$0xff] %vm71, %v396
  // Predicated region
  $region18: #{tpu_custom_call.1} parent=0 // pred_check
    _
  $region19: #{tpu_custom_call.1} parent=0 // pred_check_branch
    %400 = sbr.rel (0) target = $region21
  $region20: #{tpu_custom_call.1} parent=0 // pred_region
    _
  $region21: #{tpu_custom_call.1} parent=0 // pred_fallthru
    _
  // Predicated region
  $region22: #{tpu_custom_call.1} parent=0 // pred_check
    _
  $region23: #{tpu_custom_call.1} parent=0 // pred_check_branch
    %402 = sbr.rel (0) target = $region25
  $region24: #{tpu_custom_call.1} parent=0 // pred_region
    _
  $region25: #{tpu_custom_call.1} parent=0 // pred_fallthru
    _

</llo_original>
